<compile_context>
chip_gen: v6e
topology: v6e:2x2x1
jax: 0.10.0
libtpu: 0.0.40
codegen_flags: <defaults>
</compile_context>

<pallas_src>
import functools
import math

import jax
import jax.numpy as jnp
from jax import lax
from jax.experimental import pallas as pl
from jax.experimental.pallas import tpu as pltpu

_LANES = 128
_POOL_BLOCK_BYTES = 2 * 1024 * 1024     # ~2 MiB per kernel-1 input block
_APPLY_BLOCK_BYTES = 4 * 1024 * 1024    # ~4 MiB per kernel-2 operand block
_MAX_POOL_LANES = 256 * _LANES          # bounds the unrolled lane-chunk adds
_VMEM_LIMIT_BYTES = 32 * 1024 * 1024    # fits v5e/v6e/v7x (< 64 MiB physical)


def _pick_hw_block(hw, rows, itemsize, target_bytes, max_lanes=None):
    """Spatial block: whole extent if it fits the byte target, otherwise a
    multiple of 128 lanes sized ~target_bytes (last block may be ragged)."""
    budget = (target_bytes // max(1, rows * itemsize)) // _LANES * _LANES
    budget = max(_LANES, budget)           # rows*128 floor; batch-grouping /
    if max_lanes is not None:              # small-c kernels keep this bounded
        budget = min(budget, max_lanes)
    if hw <= budget:
        return hw                          # full extent (always a legal block)
    return budget                          # multiple of 128; ragged tail ok


def _pick_batch_block(b, c_in, itemsize, target_bytes):
    """Batch rows per kernel-1 block.  Returns the full batch or a multiple
    of 8 (keeps the (4, b_blk, C) coef output block on legal sublane tiling),
    preferring >= 2 groups so v7x megacore can split the pooling pass."""
    row_bytes = max(1, c_in * _LANES * itemsize)   # one batch at >=128 lanes
    fit = max(1, int(target_bytes // row_bytes))   # batches fitting the target
    half = -(-b // 2)                              # ceil(b/2): >=2 groups
    b_blk = min(b, fit, half) if b > 1 else 1
    if b_blk >= b:
        return b
    if b < 8:
        return b                                   # tiny batch: keep it whole
    return min(max(8, (b_blk // 8) * 8), b)


# ---------------------------------------------------------------------------
# Kernel 1: streamed global avg-pool + squeeze FC + h_sigmoid + coefficients.
# ---------------------------------------------------------------------------
def _coef_kernel(x_ref, w1_ref, b1_ref, w2s_ref, b2s_ref, coef_ref, acc_ref,
                 *, hw, hw_blk, lambda_a2, init_a, init_b):
    j = pl.program_id(1)
    n_j = pl.num_programs(1)

    if hw_blk % _LANES == 0:
        chunk, n_chunks = _LANES, hw_blk // _LANES
    else:                       # only when hw_blk == hw (single block)
        chunk, n_chunks = hw_blk, 1

    @pl.when(j == 0)
    def _init():
        acc_ref[...] = jnp.zeros_like(acc_ref)

    def accumulate(xb):
        # Lane-preserving partial sum: pure VALU adds over 128-lane chunks
        # (static, lane-aligned slices = free vreg selection).  The single
        # cross-lane XLU reduce happens once, in _finish.
        ps = xb[:, :, 0:chunk]
        for s in range(1, n_chunks):
            ps = ps + xb[:, :, s * chunk:(s + 1) * chunk]
        acc_ref[...] += ps

    x = x_ref[...].astype(jnp.float32)              # (b_blk, c, hw_blk)

    if hw % hw_blk != 0:
        # Ragged final spatial block: mask only there (cold path).
        last = n_j - 1

        @pl.when(j != last)
        def _full():
            accumulate(x)

        @pl.when(j == last)
        def _ragged():
            col = lax.broadcasted_iota(jnp.int32, (1, 1, hw_blk), 2)
            accumulate(jnp.where(col + j * hw_blk < hw, x, 0.0))
    else:
        accumulate(x)

    @pl.when(j == n_j - 1)
    def _finish():
        pooled = jnp.sum(acc_ref[...], axis=2) * (1.0 / hw)     # (b_blk, c)
        # fc: Linear(inp, squeeze) -> ReLU
        h = jnp.dot(pooled, w1_ref[...],
                    preferred_element_type=jnp.float32) + b1_ref[...]
        h = jnp.maximum(h, 0.0)
        # fc: Linear(squeeze, 4*oup) -> h_sigmoid, split order (a1, b1, a2, b2)
        scales = (lambda_a2, 1.0, lambda_a2, 1.0)
        shifts = (init_a[0], init_b[0], init_a[1], init_b[1])
        for k in range(4):
            yk = jnp.dot(h, w2s_ref[k],
                         preferred_element_type=jnp.float32) + b2s_ref[k]
            yk = jnp.clip(yk + 3.0, 0.0, 6.0) * (1.0 / 6.0)      # h_sigmoid
            coef_ref[k] = (yk - 0.5) * scales[k] + shifts[k]     # (b_blk, c)


# ---------------------------------------------------------------------------
# Kernel 2: out = max(x*a1 + b1, x*a2 + b2), broadcast per (batch, channel).
# ---------------------------------------------------------------------------
def _apply_kernel(x_ref, coef_ref, o_ref):
    x = x_ref[0]                                    # (C, hw_blk), input dtype
    dt = x.dtype
    a1 = coef_ref[0, 0].astype(dt)                  # (C, 1)
    c1 = coef_ref[1, 0].astype(dt)
    a2 = coef_ref[2, 0].astype(dt)
    c2 = coef_ref[3, 0].astype(dt)
    o_ref[0] = jnp.maximum(x * a1 + c1, x * a2 + c2)


def dyrelu_forward(x, params, x_out=None, *, lambda_a=1.0,
                   init_a=(1.0, 0.0), init_b=(0.0, 0.0),
                   donate_x_out=False,
                   pool_block_bytes=_POOL_BLOCK_BYTES,
                   apply_block_bytes=_APPLY_BLOCK_BYTES):
    """DYReLU forward (default exp == 4 path).

    params (weights stored (in, out)):
      w1: (inp, squeeze)    b1: (squeeze,)
      w2: (squeeze, 4*oup)  b2: (4*oup,)
    """
    # TODO(synk): use_spatial=True branch (ConvModule 1x1 + BN + spatial
    # softmax gate) and exp != 4 variants are not implemented (off by default).
    if x_out is None:
        x_out = x
    lambda_a2 = float(lambda_a) * 2.0               # module stores lambda_a*2

    b, c_in = x.shape[0], x.shape[1]
    hw_in = math.prod(x.shape[2:])
    c_out = x_out.shape[1]
    hw_out = math.prod(x_out.shape[2:])

    squeeze = params["w1"].shape[1]
    w1 = params["w1"].astype(jnp.float32)                       # (C_in, S)
    b1 = params["b1"].astype(jnp.float32).reshape(1, squeeze)   # (1, S)
    # Split the second Linear into its (a1, b1, a2, b2) chunks up-front so the
    # kernel never lane-slices the (B, 4*C) activation.
    w2s = jnp.transpose(
        params["w2"].astype(jnp.float32).reshape(squeeze, 4, c_out),
        (1, 0, 2))                                              # (4, S, C_out)
    b2s = params["b2"].astype(jnp.float32).reshape(4, 1, c_out)

    itemsize = x.dtype.itemsize
    x_in3 = x.reshape(b, c_in, hw_in)               # free view of NCHW/NCDHW

    # ---- kernel 1: pooled stats -> per-(batch, channel) coefficients -------
    b_blk = _pick_batch_block(b, c_in, itemsize, pool_block_bytes)
    n_bg = pl.cdiv(b, b_blk)
    hw_blk_pool = _pick_hw_block(hw_in, b_blk * c_in, itemsize,
                                 pool_block_bytes, max_lanes=_MAX_POOL_LANES)
    n_pool = pl.cdiv(hw_in, hw_blk_pool)
    acc_lanes = _LANES if hw_blk_pool % _LANES == 0 else hw_blk_pool

    coef = pl.pallas_call(
        functools.partial(_coef_kernel, hw=hw_in, hw_blk=hw_blk_pool,
                          lambda_a2=lambda_a2, init_a=tuple(init_a),
                          init_b=tuple(init_b)),
        out_shape=jax.ShapeDtypeStruct((4, b, c_out), jnp.float32),
        grid_spec=pltpu.PrefetchScalarGridSpec(
            num_scalar_prefetch=0,
            grid=(n_bg, n_pool),
            in_specs=[
                pl.BlockSpec((b_blk, c_in, hw_blk_pool),
                             lambda i, j: (i, 0, j)),
                pl.BlockSpec((c_in, squeeze), lambda i, j: (0, 0)),
                pl.BlockSpec((1, squeeze), lambda i, j: (0, 0)),
                pl.BlockSpec((4, squeeze, c_out), lambda i, j: (0, 0, 0)),
                pl.BlockSpec((4, 1, c_out), lambda i, j: (0, 0, 0)),
            ],
            out_specs=pl.BlockSpec((4, b_blk, c_out), lambda i, j: (0, i, 0)),
            scratch_shapes=[pltpu.VMEM((b_blk, c_in, acc_lanes), jnp.float32)],
        ),
        compiler_params=pltpu.CompilerParams(
            dimension_semantics=("parallel", "arbitrary"),
            vmem_limit_bytes=_VMEM_LIMIT_BYTES),
        cost_estimate=pl.CostEstimate(
            flops=2 * x.size, transcendentals=0,
            bytes_accessed=x.size * itemsize + 4 * b * c_out * 4),
    )(x_in3, w1, b1, w2s, b2s)

    # ---- kernel 2: broadcast piecewise-linear max over the full tensor -----
    x_out3 = x_out.reshape(b, c_out, hw_out)
    coef4 = coef.reshape(4, b, c_out, 1)            # channels on sublanes
    out_itemsize = x_out.dtype.itemsize
    hw_blk = _pick_hw_block(hw_out, c_out, out_itemsize, apply_block_bytes)
    n_blk = pl.cdiv(hw_out, hw_blk)

    out3 = pl.pallas_call(
        _apply_kernel,
        out_shape=jax.ShapeDtypeStruct((b, c_out, hw_out), x_out.dtype),
        grid_spec=pltpu.PrefetchScalarGridSpec(
            num_scalar_prefetch=0,
            grid=(b, n_blk),
            in_specs=[
                pl.BlockSpec((1, c_out, hw_blk), lambda i, j: (i, 0, j)),
                pl.BlockSpec((4, 1, c_out, 1), lambda i, j: (0, i, 0, 0)),
            ],
            out_specs=pl.BlockSpec((1, c_out, hw_blk), lambda i, j: (i, 0, j)),
        ),
        compiler_params=pltpu.CompilerParams(
            dimension_semantics=("parallel", "parallel"),
            vmem_limit_bytes=_VMEM_LIMIT_BYTES),
        cost_estimate=pl.CostEstimate(
            flops=5 * x_out.size, transcendentals=0,
            bytes_accessed=2 * x_out.size * out_itemsize + 4 * b * c_out * 4),
        input_output_aliases=({0: 0} if donate_x_out else {}),
    )(x_out3, coef4)

    return out3.reshape(x_out.shape)


def dyrelu_reference(x, params, x_out=None, *, lambda_a=1.0,
                     init_a=(1.0, 0.0), init_b=(0.0, 0.0)):
    """Pure-JAX reference of the PyTorch DYReLU forward (exp == 4 path)."""
    if x_out is None:
        x_out = x
    lambda_a2 = float(lambda_a) * 2.0
    b, c_in = x.shape[0], x.shape[1]
    c_out = x_out.shape[1]
    y = jnp.mean(x.reshape(b, c_in, -1).astype(jnp.float32), axis=2)
    h = jnp.maximum(y @ params["w1"] + params["b1"], 0.0)
    z = h @ params["w2"] + params["b2"]
    z = jnp.clip(z + 3.0, 0.0, 6.0) / 6.0                       # h_sigmoid
    a1, b1, a2, b2 = jnp.split(z, 4, axis=1)
    a1 = (a1 - 0.5) * lambda_a2 + init_a[0]
    a2 = (a2 - 0.5) * lambda_a2 + init_a[1]
    b1 = b1 - 0.5 + init_b[0]
    b2 = b2 - 0.5 + init_b[1]
    bshape = (b, c_out) + (1,) * (x_out.ndim - 2)
    xo = x_out.astype(jnp.float32)
    out = jnp.maximum(xo * a1.reshape(bshape) + b1.reshape(bshape),
                      xo * a2.reshape(bshape) + b2.reshape(bshape))
    return out.astype(x_out.dtype)


if __name__ == "__main__":
    key = jax.random.PRNGKey(0)
    B, C, H, W = 2, 8, 16, 16          # inp == oup == 8, reduction=4 -> squeeze=2
    squeeze = C // 4
    kx, k1, k2, k3, k4, k5 = jax.random.split(key, 6)
    x = jax.random.normal(kx, (B, C, H, W), dtype=jnp.float32) * 4.0
    params = {
        "w1": jax.random.normal(k1, (C, squeeze), jnp.float32) / math.sqrt(C),
        "b1": jax.random.normal(k2, (squeeze,), jnp.float32) * 0.1,
        "w2": jax.random.normal(k3, (squeeze, 4 * C), jnp.float32)
              / math.sqrt(squeeze),
        "b2": jax.random.normal(k4, (4 * C,), jnp.float32) * 0.1,
    }

    # Main case: 128-multiple spatial extent, single-block fast path.
    out = jax.block_until_ready(jax.jit(dyrelu_forward)(x, params))
    ref = dyrelu_reference(x, params)
    assert out.shape == x.shape and out.dtype == x.dtype
    max_err = float(jnp.max(jnp.abs(out - ref)))
    assert jnp.allclose(out, ref, atol=5e-3, rtol=5e-3), max_err

    # Ragged case: H*W = 260 with forced-small blocks exercises the masked
    # streamed reduction (kernel 1) and the ragged-tail output block (kernel 2).
    x2 = jax.random.normal(k5, (B, C, 5, 52), dtype=jnp.float32) * 3.0
    f2 = jax.jit(functools.partial(dyrelu_forward,
                                   pool_block_bytes=8192,
                                   apply_block_bytes=8192))
    out2 = jax.block_until_ready(f2(x2, params))
    ref2 = dyrelu_reference(x2, params)
    max_err2 = float(jnp.max(jnp.abs(out2 - ref2)))
    assert jnp.allclose(out2, ref2, atol=5e-3, rtol=5e-3), max_err2

    print("KERNEL_OK")
</pallas_src>

<mosaic_0001>
module attributes {stable_mosaic.version = 11 : i64} {
  func.func @_apply_kernel(%arg0: i32, %arg1: i32, %arg2: memref<1x8x256xf32, #tpu.memory_space<vmem>>, %arg3: memref<4x1x8x1xf32, #tpu.memory_space<vmem>>, %arg4: memref<1x8x256xf32, #tpu.memory_space<vmem>>) attributes {dimension_semantics = [#tpu.dimension_semantics<parallel>, #tpu.dimension_semantics<parallel>], iteration_bounds = array<i64: 2, 1>, scalar_prefetch = 0 : i64, scratch_operands = 0 : i64, tpu.core_type = #tpu.core_type<tc>, window_params = [{transform_indices = @transform_0, window_bounds = array<i64: 1, 8, 256>}, {transform_indices = @transform_1, window_bounds = array<i64: 4, 1, 8, 1>}, {transform_indices = @transform_2, window_bounds = array<i64: 1, 8, 256>}]} {
    %c0 = arith.constant 0 : index
    %c0_0 = arith.constant 0 : index
    %c0_1 = arith.constant 0 : index
    %0 = vector.load %arg2[%c0, %c0_0, %c0_1] : memref<1x8x256xf32, #tpu.memory_space<vmem>>, vector<1x8x256xf32>
    %1 = vector.shape_cast %0 : vector<1x8x256xf32> to vector<8x256xf32>
    %c0_2 = arith.constant 0 : index
    %c0_3 = arith.constant 0 : index
    %c0_4 = arith.constant 0 : index
    %c0_5 = arith.constant 0 : index
    %2 = vector.load %arg3[%c0_2, %c0_3, %c0_4, %c0_5] : memref<4x1x8x1xf32, #tpu.memory_space<vmem>>, vector<1x1x8x1xf32>
    %3 = vector.shape_cast %2 : vector<1x1x8x1xf32> to vector<8x1xf32>
    %c1 = arith.constant 1 : index
    %c0_6 = arith.constant 0 : index
    %c0_7 = arith.constant 0 : index
    %c0_8 = arith.constant 0 : index
    %4 = vector.load %arg3[%c1, %c0_6, %c0_7, %c0_8] : memref<4x1x8x1xf32, #tpu.memory_space<vmem>>, vector<1x1x8x1xf32>
    %5 = vector.shape_cast %4 : vector<1x1x8x1xf32> to vector<8x1xf32>
    %c2 = arith.constant 2 : index
    %c0_9 = arith.constant 0 : index
    %c0_10 = arith.constant 0 : index
    %c0_11 = arith.constant 0 : index
    %6 = vector.load %arg3[%c2, %c0_9, %c0_10, %c0_11] : memref<4x1x8x1xf32, #tpu.memory_space<vmem>>, vector<1x1x8x1xf32>
    %7 = vector.shape_cast %6 : vector<1x1x8x1xf32> to vector<8x1xf32>
    %c3 = arith.constant 3 : index
    %c0_12 = arith.constant 0 : index
    %c0_13 = arith.constant 0 : index
    %c0_14 = arith.constant 0 : index
    %8 = vector.load %arg3[%c3, %c0_12, %c0_13, %c0_14] : memref<4x1x8x1xf32, #tpu.memory_space<vmem>>, vector<1x1x8x1xf32>
    %9 = vector.shape_cast %8 : vector<1x1x8x1xf32> to vector<8x1xf32>
    %10 = vector.broadcast %3 : vector<8x1xf32> to vector<8x256xf32>
    %11 = arith.mulf %1, %10 : vector<8x256xf32>
    %12 = vector.broadcast %5 : vector<8x1xf32> to vector<8x256xf32>
    %13 = arith.addf %11, %12 : vector<8x256xf32>
    %14 = vector.broadcast %7 : vector<8x1xf32> to vector<8x256xf32>
    %15 = arith.mulf %1, %14 : vector<8x256xf32>
    %16 = vector.broadcast %9 : vector<8x1xf32> to vector<8x256xf32>
    %17 = arith.addf %15, %16 : vector<8x256xf32>
    %18 = arith.maximumf %13, %17 : vector<8x256xf32>
    %c0_15 = arith.constant 0 : index
    %c0_16 = arith.constant 0 : index
    %c0_17 = arith.constant 0 : index
    %19 = vector.load %arg4[%c0_15, %c0_16, %c0_17] : memref<1x8x256xf32, #tpu.memory_space<vmem>>, vector<1x8x256xf32>
    %20 = vector.shape_cast %19 : vector<1x8x256xf32> to vector<8x256xf32>
    %21 = vector.shape_cast %18 : vector<8x256xf32> to vector<1x8x256xf32>
    tpu.vector_store %arg4[%c0_15, %c0_16, %c0_17], %21 {strides = array<i32>} : memref<1x8x256xf32, #tpu.memory_space<vmem>>, vector<1x8x256xf32>,
    return
  }
  func.func @transform_0(%arg0: i32, %arg1: i32) -> (i32, i32, i32) {
    %c0_i32 = arith.constant 0 : i32
    %c0_i32_0 = arith.constant 0 : i32
    return %arg0, %c0_i32, %arg1 : i32, i32, i32
  }
  func.func @transform_1(%arg0: i32, %arg1: i32) -> (i32, i32, i32, i32) {
    %c0_i32 = arith.constant 0 : i32
    %c0_i32_0 = arith.constant 0 : i32
    %c0_i32_1 = arith.constant 0 : i32
    %c0_i32_2 = arith.constant 0 : i32
    return %c0_i32, %arg0, %c0_i32_0, %c0_i32_1 : i32, i32, i32, i32
  }
  func.func @transform_2(%arg0: i32, %arg1: i32) -> (i32, i32, i32) {
    %c0_i32 = arith.constant 0 : i32
    %c0_i32_0 = arith.constant 0 : i32
    return %arg0, %c0_i32, %arg1 : i32, i32, i32
  }
}

module attributes {stable_mosaic.version = 11 : i64} {
  func.func @_coef_kernel(%arg0: i32, %arg1: i32, %arg2: memref<2x8x256xf32, #tpu.memory_space<vmem>>, %arg3: memref<8x2xf32, #tpu.memory_space<vmem>>, %arg4: memref<1x2xf32, #tpu.memory_space<vmem>>, %arg5: memref<4x2x8xf32, #tpu.memory_space<vmem>>, %arg6: memref<4x1x8xf32, #tpu.memory_space<vmem>>, %arg7: memref<4x2x8xf32, #tpu.memory_space<vmem>>, %arg8: memref<2x8x128xf32, #tpu.memory_space<vmem>>) attributes {dimension_semantics = [#tpu.dimension_semantics<parallel>, #tpu.dimension_semantics<arbitrary>], iteration_bounds = array<i64: 1, 1>, scalar_prefetch = 0 : i64, scratch_operands = 1 : i64, tpu.core_type = #tpu.core_type<tc>, window_params = [{transform_indices = @transform_0, window_bounds = array<i64: 2, 8, 256>}, {pipeline_mode = #tpu.pipeline_mode<synchronous>, transform_indices = @transform_1, window_bounds = array<i64: 8, 2>}, {pipeline_mode = #tpu.pipeline_mode<synchronous>, transform_indices = @transform_2, window_bounds = array<i64: 1, 2>}, {pipeline_mode = #tpu.pipeline_mode<synchronous>, transform_indices = @transform_3, window_bounds = array<i64: 4, 2, 8>}, {pipeline_mode = #tpu.pipeline_mode<synchronous>, transform_indices = @transform_4, window_bounds = array<i64: 4, 1, 8>}, {transform_indices = @transform_5, window_bounds = array<i64: 4, 2, 8>}]} {
    %c0_i32 = arith.constant 0 : i32
    %0 = arith.cmpi eq, %arg1, %c0_i32 : i32
    %1 = arith.extui %0 : i1 to i32
    %c0_i32_0 = arith.constant 0 : i32
    %2 = arith.cmpi ne, %1, %c0_i32_0 : i32
    scf.if %2 {
      %cst = arith.constant 0.000000e+00 : f32
      %13 = vector.broadcast %cst : f32 to vector<2x8x128xf32>
      %c0_11 = arith.constant 0 : index
      %c0_12 = arith.constant 0 : index
      %c0_13 = arith.constant 0 : index
      %14 = vector.load %arg8[%c0_11, %c0_12, %c0_13] : memref<2x8x128xf32, #tpu.memory_space<vmem>>, vector<2x8x128xf32>
      tpu.vector_store %arg8[%c0_11, %c0_12, %c0_13], %13 {strides = array<i32>} : memref<2x8x128xf32, #tpu.memory_space<vmem>>, vector<2x8x128xf32>,
    } else {
    }
    %c0 = arith.constant 0 : index
    %c0_1 = arith.constant 0 : index
    %c0_2 = arith.constant 0 : index
    %3 = vector.load %arg2[%c0, %c0_1, %c0_2] : memref<2x8x256xf32, #tpu.memory_space<vmem>>, vector<2x8x256xf32>
    %4 = vector.extract_strided_slice %3 {offsets = [0, 0, 0], sizes = [2, 8, 128], strides = [1, 1, 1]} : vector<2x8x256xf32> to vector<2x8x128xf32>
    %5 = vector.extract_strided_slice %3 {offsets = [0, 0, 128], sizes = [2, 8, 128], strides = [1, 1, 1]} : vector<2x8x256xf32> to vector<2x8x128xf32>
    %6 = arith.addf %4, %5 : vector<2x8x128xf32>
    %c0_3 = arith.constant 0 : index
    %c0_4 = arith.constant 0 : index
    %c0_5 = arith.constant 0 : index
    %7 = vector.load %arg8[%c0_3, %c0_4, %c0_5] : memref<2x8x128xf32, #tpu.memory_space<vmem>>, vector<2x8x128xf32>
    %8 = arith.addf %7, %6 : vector<2x8x128xf32>
    %c0_6 = arith.constant 0 : index
    %c0_7 = arith.constant 0 : index
    %c0_8 = arith.constant 0 : index
    %9 = vector.load %arg8[%c0_6, %c0_7, %c0_8] : memref<2x8x128xf32, #tpu.memory_space<vmem>>, vector<2x8x128xf32>
    tpu.vector_store %arg8[%c0_6, %c0_7, %c0_8], %8 {strides = array<i32>} : memref<2x8x128xf32, #tpu.memory_space<vmem>>, vector<2x8x128xf32>,
    %c0_i32_9 = arith.constant 0 : i32
    %10 = arith.cmpi eq, %arg1, %c0_i32_9 : i32
    %11 = arith.extui %10 : i1 to i32
    %c0_i32_10 = arith.constant 0 : i32
    %12 = arith.cmpi ne, %11, %c0_i32_10 : i32
    scf.if %12 {
      %c0_11 = arith.constant 0 : index
      %c0_12 = arith.constant 0 : index
      %c0_13 = arith.constant 0 : index
      %13 = vector.load %arg8[%c0_11, %c0_12, %c0_13] : memref<2x8x128xf32, #tpu.memory_space<vmem>>, vector<2x8x128xf32>
      %cst = arith.constant dense<0.000000e+00> : vector<2x8xf32>
      %14 = vector.multi_reduction <add>, %13, %cst [2] : vector<2x8x128xf32> to vector<2x8xf32>
      %cst_14 = arith.constant 3.906250e-03 : f32
      %15 = vector.broadcast %cst_14 : f32 to vector<2x8xf32>
      %16 = arith.mulf %14, %15 : vector<2x8xf32>
      %c0_15 = arith.constant 0 : index
      %c0_16 = arith.constant 0 : index
      %17 = vector.load %arg3[%c0_15, %c0_16] : memref<8x2xf32, #tpu.memory_space<vmem>>, vector<8x2xf32>
      %cst_17 = arith.constant dense<0.000000e+00> : vector<2x2xf32>
      %18 = tpu.matmul %16, %17, %cst_17 {dimension_numbers = #tpu.dot_dimension_numbers<[1], [0], [0], [1], [0, 0, 1, 1], [], []>} : vector<2x8xf32>, vector<8x2xf32>, vector<2x2xf32> -> vector<2x2xf32>
      %c0_18 = arith.constant 0 : index
      %c0_19 = arith.constant 0 : index
      %19 = vector.load %arg4[%c0_18, %c0_19] : memref<1x2xf32, #tpu.memory_space<vmem>>, vector<1x2xf32>
      %20 = vector.broadcast %19 : vector<1x2xf32> to vector<2x2xf32>
      %21 = arith.addf %18, %20 : vector<2x2xf32>
      %cst_20 = arith.constant 0.000000e+00 : f32
      %22 = vector.broadcast %cst_20 : f32 to vector<2x2xf32>
      %23 = arith.maximumf %21, %22 : vector<2x2xf32>
      %c0_21 = arith.constant 0 : index
      %c0_22 = arith.constant 0 : index
      %c0_23 = arith.constant 0 : index
      %24 = vector.load %arg5[%c0_21, %c0_22, %c0_23] : memref<4x2x8xf32, #tpu.memory_space<vmem>>, vector<1x2x8xf32>
      %25 = vector.shape_cast %24 : vector<1x2x8xf32> to vector<2x8xf32>
      %cst_24 = arith.constant dense<0.000000e+00> : vector<2x8xf32>
      %26 = tpu.matmul %23, %25, %cst_24 {dimension_numbers = #tpu.dot_dimension_numbers<[1], [0], [0], [1], [0, 0, 1, 1], [], []>} : vector<2x2xf32>, vector<2x8xf32>, vector<2x8xf32> -> vector<2x8xf32>
      %c0_25 = arith.constant 0 : index
      %c0_26 = arith.constant 0 : index
      %c0_27 = arith.constant 0 : index
      %27 = vector.load %arg6[%c0_25, %c0_26, %c0_27] : memref<4x1x8xf32, #tpu.memory_space<vmem>>, vector<1x1x8xf32>
      %28 = vector.shape_cast %27 : vector<1x1x8xf32> to vector<1x8xf32>
      %29 = vector.broadcast %28 : vector<1x8xf32> to vector<2x8xf32>
      %30 = arith.addf %26, %29 : vector<2x8xf32>
      %cst_28 = arith.constant 3.000000e+00 : f32
      %31 = vector.broadcast %cst_28 : f32 to vector<2x8xf32>
      %32 = arith.addf %30, %31 : vector<2x8xf32>
      %cst_29 = arith.constant 0.000000e+00 : f32
      %cst_30 = arith.constant 6.000000e+00 : f32
      %33 = vector.broadcast %cst_29 : f32 to vector<2x8xf32>
      %34 = arith.maximumf %33, %32 : vector<2x8xf32>
      %35 = vector.broadcast %cst_30 : f32 to vector<2x8xf32>
      %36 = arith.minimumf %35, %34 : vector<2x8xf32>
      %cst_31 = arith.constant 0.166666672 : f32
      %37 = vector.broadcast %cst_31 : f32 to vector<2x8xf32>
      %38 = arith.mulf %36, %37 : vector<2x8xf32>
      %cst_32 = arith.constant 5.000000e-01 : f32
      %39 = vector.broadcast %cst_32 : f32 to vector<2x8xf32>
      %40 = arith.subf %38, %39 : vector<2x8xf32>
      %cst_33 = arith.constant 2.000000e+00 : f32
      %41 = vector.broadcast %cst_33 : f32 to vector<2x8xf32>
      %42 = arith.mulf %40, %41 : vector<2x8xf32>
      %cst_34 = arith.constant 1.000000e+00 : f32
      %43 = vector.broadcast %cst_34 : f32 to vector<2x8xf32>
      %44 = arith.addf %42, %43 : vector<2x8xf32>
      %c0_35 = arith.constant 0 : index
      %c0_36 = arith.constant 0 : index
      %c0_37 = arith.constant 0 : index
      %45 = vector.load %arg7[%c0_35, %c0_36, %c0_37] : memref<4x2x8xf32, #tpu.memory_space<vmem>>, vector<1x2x8xf32>
      %46 = vector.shape_cast %45 : vector<1x2x8xf32> to vector<2x8xf32>
      %47 = vector.shape_cast %44 : vector<2x8xf32> to vector<1x2x8xf32>
      tpu.vector_store %arg7[%c0_35, %c0_36, %c0_37], %47 {strides = array<i32>} : memref<4x2x8xf32, #tpu.memory_space<vmem>>, vector<1x2x8xf32>,
      %c1 = arith.constant 1 : index
      %c0_38 = arith.constant 0 : index
      %c0_39 = arith.constant 0 : index
      %48 = vector.load %arg5[%c1, %c0_38, %c0_39] : memref<4x2x8xf32, #tpu.memory_space<vmem>>, vector<1x2x8xf32>
      %49 = vector.shape_cast %48 : vector<1x2x8xf32> to vector<2x8xf32>
      %cst_40 = arith.constant dense<0.000000e+00> : vector<2x8xf32>
      %50 = tpu.matmul %23, %49, %cst_40 {dimension_numbers = #tpu.dot_dimension_numbers<[1], [0], [0], [1], [0, 0, 1, 1], [], []>} : vector<2x2xf32>, vector<2x8xf32>, vector<2x8xf32> -> vector<2x8xf32>
      %c1_41 = arith.constant 1 : index
      %c0_42 = arith.constant 0 : index
      %c0_43 = arith.constant 0 : index
      %51 = vector.load %arg6[%c1_41, %c0_42, %c0_43] : memref<4x1x8xf32, #tpu.memory_space<vmem>>, vector<1x1x8xf32>
      %52 = vector.shape_cast %51 : vector<1x1x8xf32> to vector<1x8xf32>
      %53 = vector.broadcast %52 : vector<1x8xf32> to vector<2x8xf32>
      %54 = arith.addf %50, %53 : vector<2x8xf32>
      %cst_44 = arith.constant 3.000000e+00 : f32
      %55 = vector.broadcast %cst_44 : f32 to vector<2x8xf32>
      %56 = arith.addf %54, %55 : vector<2x8xf32>
      %cst_45 = arith.constant 0.000000e+00 : f32
      %cst_46 = arith.constant 6.000000e+00 : f32
      %57 = vector.broadcast %cst_45 : f32 to vector<2x8xf32>
      %58 = arith.maximumf %57, %56 : vector<2x8xf32>
      %59 = vector.broadcast %cst_46 : f32 to vector<2x8xf32>
      %60 = arith.minimumf %59, %58 : vector<2x8xf32>
      %cst_47 = arith.constant 0.166666672 : f32
      %61 = vector.broadcast %cst_47 : f32 to vector<2x8xf32>
      %62 = arith.mulf %60, %61 : vector<2x8xf32>
      %cst_48 = arith.constant 5.000000e-01 : f32
      %63 = vector.broadcast %cst_48 : f32 to vector<2x8xf32>
      %64 = arith.subf %62, %63 : vector<2x8xf32>
      %cst_49 = arith.constant 1.000000e+00 : f32
      %65 = vector.broadcast %cst_49 : f32 to vector<2x8xf32>
      %66 = arith.mulf %64, %65 : vector<2x8xf32>
      %cst_50 = arith.constant 0.000000e+00 : f32
      %67 = vector.broadcast %cst_50 : f32 to vector<2x8xf32>
      %68 = arith.addf %66, %67 : vector<2x8xf32>
      %c1_51 = arith.constant 1 : index
      %c0_52 = arith.constant 0 : index
      %c0_53 = arith.constant 0 : index
      %69 = vector.load %arg7[%c1_51, %c0_52, %c0_53] : memref<4x2x8xf32, #tpu.memory_space<vmem>>, vector<1x2x8xf32>
      %70 = vector.shape_cast %69 : vector<1x2x8xf32> to vector<2x8xf32>
      %71 = vector.shape_cast %68 : vector<2x8xf32> to vector<1x2x8xf32>
      tpu.vector_store %arg7[%c1_51, %c0_52, %c0_53], %71 {strides = array<i32>} : memref<4x2x8xf32, #tpu.memory_space<vmem>>, vector<1x2x8xf32>,
      %c2 = arith.constant 2 : index
      %c0_54 = arith.constant 0 : index
      %c0_55 = arith.constant 0 : index
      %72 = vector.load %arg5[%c2, %c0_54, %c0_55] : memref<4x2x8xf32, #tpu.memory_space<vmem>>, vector<1x2x8xf32>
      %73 = vector.shape_cast %72 : vector<1x2x8xf32> to vector<2x8xf32>
      %cst_56 = arith.constant dense<0.000000e+00> : vector<2x8xf32>
      %74 = tpu.matmul %23, %73, %cst_56 {dimension_numbers = #tpu.dot_dimension_numbers<[1], [0], [0], [1], [0, 0, 1, 1], [], []>} : vector<2x2xf32>, vector<2x8xf32>, vector<2x8xf32> -> vector<2x8xf32>
      %c2_57 = arith.constant 2 : index
      %c0_58 = arith.constant 0 : index
      %c0_59 = arith.constant 0 : index
      %75 = vector.load %arg6[%c2_57, %c0_58, %c0_59] : memref<4x1x8xf32, #tpu.memory_space<vmem>>, vector<1x1x8xf32>
      %76 = vector.shape_cast %75 : vector<1x1x8xf32> to vector<1x8xf32>
      %77 = vector.broadcast %76 : vector<1x8xf32> to vector<2x8xf32>
      %78 = arith.addf %74, %77 : vector<2x8xf32>
      %cst_60 = arith.constant 3.000000e+00 : f32
      %79 = vector.broadcast %cst_60 : f32 to vector<2x8xf32>
      %80 = arith.addf %78, %79 : vector<2x8xf32>
      %cst_61 = arith.constant 0.000000e+00 : f32
      %cst_62 = arith.constant 6.000000e+00 : f32
      %81 = vector.broadcast %cst_61 : f32 to vector<2x8xf32>
      %82 = arith.maximumf %81, %80 : vector<2x8xf32>
      %83 = vector.broadcast %cst_62 : f32 to vector<2x8xf32>
      %84 = arith.minimumf %83, %82 : vector<2x8xf32>
      %cst_63 = arith.constant 0.166666672 : f32
      %85 = vector.broadcast %cst_63 : f32 to vector<2x8xf32>
      %86 = arith.mulf %84, %85 : vector<2x8xf32>
      %cst_64 = arith.constant 5.000000e-01 : f32
      %87 = vector.broadcast %cst_64 : f32 to vector<2x8xf32>
      %88 = arith.subf %86, %87 : vector<2x8xf32>
      %cst_65 = arith.constant 2.000000e+00 : f32
      %89 = vector.broadcast %cst_65 : f32 to vector<2x8xf32>
      %90 = arith.mulf %88, %89 : vector<2x8xf32>
      %cst_66 = arith.constant 0.000000e+00 : f32
      %91 = vector.broadcast %cst_66 : f32 to vector<2x8xf32>
      %92 = arith.addf %90, %91 : vector<2x8xf32>
      %c2_67 = arith.constant 2 : index
      %c0_68 = arith.constant 0 : index
      %c0_69 = arith.constant 0 : index
      %93 = vector.load %arg7[%c2_67, %c0_68, %c0_69] : memref<4x2x8xf32, #tpu.memory_space<vmem>>, vector<1x2x8xf32>
      %94 = vector.shape_cast %93 : vector<1x2x8xf32> to vector<2x8xf32>
      %95 = vector.shape_cast %92 : vector<2x8xf32> to vector<1x2x8xf32>
      tpu.vector_store %arg7[%c2_67, %c0_68, %c0_69], %95 {strides = array<i32>} : memref<4x2x8xf32, #tpu.memory_space<vmem>>, vector<1x2x8xf32>,
      %c3 = arith.constant 3 : index
      %c0_70 = arith.constant 0 : index
      %c0_71 = arith.constant 0 : index
      %96 = vector.load %arg5[%c3, %c0_70, %c0_71] : memref<4x2x8xf32, #tpu.memory_space<vmem>>, vector<1x2x8xf32>
      %97 = vector.shape_cast %96 : vector<1x2x8xf32> to vector<2x8xf32>
      %cst_72 = arith.constant dense<0.000000e+00> : vector<2x8xf32>
      %98 = tpu.matmul %23, %97, %cst_72 {dimension_numbers = #tpu.dot_dimension_numbers<[1], [0], [0], [1], [0, 0, 1, 1], [], []>} : vector<2x2xf32>, vector<2x8xf32>, vector<2x8xf32> -> vector<2x8xf32>
      %c3_73 = arith.constant 3 : index
      %c0_74 = arith.constant 0 : index
      %c0_75 = arith.constant 0 : index
      %99 = vector.load %arg6[%c3_73, %c0_74, %c0_75] : memref<4x1x8xf32, #tpu.memory_space<vmem>>, vector<1x1x8xf32>
      %100 = vector.shape_cast %99 : vector<1x1x8xf32> to vector<1x8xf32>
      %101 = vector.broadcast %100 : vector<1x8xf32> to vector<2x8xf32>
      %102 = arith.addf %98, %101 : vector<2x8xf32>
      %cst_76 = arith.constant 3.000000e+00 : f32
      %103 = vector.broadcast %cst_76 : f32 to vector<2x8xf32>
      %104 = arith.addf %102, %103 : vector<2x8xf32>
      %cst_77 = arith.constant 0.000000e+00 : f32
      %cst_78 = arith.constant 6.000000e+00 : f32
      %105 = vector.broadcast %cst_77 : f32 to vector<2x8xf32>
      %106 = arith.maximumf %105, %104 : vector<2x8xf32>
      %107 = vector.broadcast %cst_78 : f32 to vector<2x8xf32>
      %108 = arith.minimumf %107, %106 : vector<2x8xf32>
      %cst_79 = arith.constant 0.166666672 : f32
      %109 = vector.broadcast %cst_79 : f32 to vector<2x8xf32>
      %110 = arith.mulf %108, %109 : vector<2x8xf32>
      %cst_80 = arith.constant 5.000000e-01 : f32
      %111 = vector.broadcast %cst_80 : f32 to vector<2x8xf32>
      %112 = arith.subf %110, %111 : vector<2x8xf32>
      %cst_81 = arith.constant 1.000000e+00 : f32
      %113 = vector.broadcast %cst_81 : f32 to vector<2x8xf32>
      %114 = arith.mulf %112, %113 : vector<2x8xf32>
      %cst_82 = arith.constant 0.000000e+00 : f32
      %115 = vector.broadcast %cst_82 : f32 to vector<2x8xf32>
      %116 = arith.addf %114, %115 : vector<2x8xf32>
      %c3_83 = arith.constant 3 : index
      %c0_84 = arith.constant 0 : index
      %c0_85 = arith.constant 0 : index
      %117 = vector.load %arg7[%c3_83, %c0_84, %c0_85] : memref<4x2x8xf32, #tpu.memory_space<vmem>>, vector<1x2x8xf32>
      %118 = vector.shape_cast %117 : vector<1x2x8xf32> to vector<2x8xf32>
      %119 = vector.shape_cast %116 : vector<2x8xf32> to vector<1x2x8xf32>
      tpu.vector_store %arg7[%c3_83, %c0_84, %c0_85], %119 {strides = array<i32>} : memref<4x2x8xf32, #tpu.memory_space<vmem>>, vector<1x2x8xf32>,
    } else {
    }
    return
  }
  func.func @transform_0(%arg0: i32, %arg1: i32) -> (i32, i32, i32) {
    %c0_i32 = arith.constant 0 : i32
    %c0_i32_0 = arith.constant 0 : i32
    return %arg0, %c0_i32, %arg1 : i32, i32, i32
  }
  func.func @transform_1(%arg0: i32, %arg1: i32) -> (i32, i32) {
    %c0_i32 = arith.constant 0 : i32
    %c0_i32_0 = arith.constant 0 : i32
    %c0_i32_1 = arith.constant 0 : i32
    return %c0_i32, %c0_i32_0 : i32, i32
  }
  func.func @transform_2(%arg0: i32, %arg1: i32) -> (i32, i32) {
    %c0_i32 = arith.constant 0 : i32
    %c0_i32_0 = arith.constant 0 : i32
    %c0_i32_1 = arith.constant 0 : i32
    return %c0_i32, %c0_i32_0 : i32, i32
  }
  func.func @transform_3(%arg0: i32, %arg1: i32) -> (i32, i32, i32) {
    %c0_i32 = arith.constant 0 : i32
    %c0_i32_0 = arith.constant 0 : i32
    %c0_i32_1 = arith.constant 0 : i32
    %c0_i32_2 = arith.constant 0 : i32
    return %c0_i32, %c0_i32_0, %c0_i32_1 : i32, i32, i32
  }
  func.func @transform_4(%arg0: i32, %arg1: i32) -> (i32, i32, i32) {
    %c0_i32 = arith.constant 0 : i32
    %c0_i32_0 = arith.constant 0 : i32
    %c0_i32_1 = arith.constant 0 : i32
    %c0_i32_2 = arith.constant 0 : i32
    return %c0_i32, %c0_i32_0, %c0_i32_1 : i32, i32, i32
  }
  func.func @transform_5(%arg0: i32, %arg1: i32) -> (i32, i32, i32) {
    %c0_i32 = arith.constant 0 : i32
    %c0_i32_0 = arith.constant 0 : i32
    %c0_i32_1 = arith.constant 0 : i32
    return %c0_i32, %arg0, %c0_i32_0 : i32, i32, i32
  }
}

</mosaic_0001>

<llo_original>
// kernel: dyrelu_forward.3
$region0: #{dyrelu_forward.3}
  #allocation0 [shape = 'u32[]', space=smem, size = 0x4, offset = 0x4, fixed_abs, tag = 'smem constant byte address 0x4 - core index']
  #allocation1 [shape = 'u32[144,128]{1,0:T(1,128)}', space=vmem, size = 0x12000, scoped, tag = 'internal scratch']
  %s0 = inlined_call_operand.vmem [shape: f32[2,8,256], index: 0, kind: input, shape index: {}]
  %s1 = inlined_call_operand.vmem [shape: f32[4,2,8,1], index: 1, kind: input, shape index: {}]
  %s2 = inlined_call_operand.vmem [shape: f32[2,8,256], index: 2, kind: output, shape index: {}]
  %s3 = sld [smem:[#allocation0]]
  $region79: #{dyrelu_forward.3} parent=0
    _
  %s5 = ssub.s32 1, %s3
  %s6 = scalar_select 0, %s5, %s3
  $region1: #{dyrelu_forward.3} parent=0
    #allocation2 [shape = 'u8[32768]{0}', space=vmem, size = 0x8000, scoped, tag = 'input window, operand 1']
    loop: start=0, step=1, limit=4
    $region2: #{dyrelu_forward.3} parent=1 // loop_pre_header
      _
    $region3: #{dyrelu_forward.3} parent=1 // loop_header
      %s8 = sphi 0, %s12
      %p9 = scmp.ge.s32.totalorder %s8, 4
      %s15 = sphi 0, %s27
      %s16 = sphi 0, %s23
      %s17 = sphi 0, %s15
      %s18 = sphi 0, %s16
      %s19 = sphi 0, %s17
      %s20 = sphi 0, %s18
      %s32 = sphi 0, %s34
      %s35 = sphi 0, %s32
      %s36 = sphi 0, %s35
      %s52 = sphi 0, %s36
      %s58 = sphi 0, %s60
      %s61 = sphi 0, %s58
      %s62 = sphi 0, %s61
      %s78 = sphi 0, %s62
      %s86 = sphi 0, %s88
      %s89 = sphi 0, %s86
      %s90 = sphi 0, %s89
      %s106 = sphi 0, %s90
    $region4: #{dyrelu_forward.3} parent=1 // loop_header_branch
      %11 = sbr.rel (%p9) target = $region8
    $region5: #{dyrelu_forward.3} parent=1 // loop_body
      %s13 = ssub.s32 %s8, 1
      %s14 = ssub.s32 %s8, 2
      %s21 = sadd.s32 1, %s16
      %p22 = scmp.ge.s32.totalorder %s21, 1
      %s23 = scalar_select %p22, 0, %s21
      %s24 = sadd.s32 1, %s15
      %s25 = scalar_select %p22, %s24, %s15
      %p26 = scmp.ge.s32.totalorder %s25, 2
      %s27 = scalar_select %p26, 0, %s25
      %s28 = ssub.s32 %s15, %s27
      %s29 = ssub.s32 %s16, %s23
      %s30 = sor.u32 %s28, %s29
      %p31 = scmp.eq.s32.totalorder %s30, 0
      %s33 = sadd.s32 %s32, 1
      %s34 = scalar_select %p31, %s32, %s33
      %p37 = pneg %p31
      %p38 = scmp.eq.s32.totalorder %s8, 1
      %p39 = por %p37, %p38
      %p40 = scmp.ne.s32.totalorder %s32, %s35
      %p41 = scmp.eq.s32.totalorder %s8, 0
      %p42 = por %p40, %p41
      %p43 = scmp.ne.s32.totalorder %s32, %s35
      %p44 = scmp.eq.s32.totalorder %s13, 1
      %p45 = por %p43, %p44
      %p46 = scmp.ne.s32.totalorder %s35, %s36
      %p47 = scmp.eq.s32.totalorder %s13, 0
      %p48 = por %p46, %p47
      %p49 = scmp.ne.s32.totalorder %s35, %s36
      %p50 = scmp.eq.s32.totalorder %s14, 1
      %p51 = por %p49, %p50
      %p53 = scmp.ne.s32.totalorder %s36, %s52
      %p54 = scmp.eq.s32.totalorder %s14, 0
      %p55 = por %p53, %p54
      %s56 = ssub.s32 %s15, %s27
      %p57 = scmp.eq.s32.totalorder %s56, 0
      %s59 = sadd.s32 %s58, 1
      %s60 = scalar_select %p57, %s58, %s59
      %p63 = pneg %p57
      %p64 = scmp.eq.s32.totalorder %s8, 1
      %p65 = por %p63, %p64
      %p66 = scmp.ne.s32.totalorder %s58, %s61
      %p67 = scmp.eq.s32.totalorder %s8, 0
      %p68 = por %p66, %p67
      %p69 = scmp.ne.s32.totalorder %s58, %s61
      %p70 = scmp.eq.s32.totalorder %s13, 1
      %p71 = por %p69, %p70
      %p72 = scmp.ne.s32.totalorder %s61, %s62
      %p73 = scmp.eq.s32.totalorder %s13, 0
      %p74 = por %p72, %p73
      %p75 = scmp.ne.s32.totalorder %s61, %s62
      %p76 = scmp.eq.s32.totalorder %s14, 1
      %p77 = por %p75, %p76
      %p79 = scmp.ne.s32.totalorder %s62, %s78
      %p80 = scmp.eq.s32.totalorder %s14, 0
      %p81 = por %p79, %p80
      %s82 = ssub.s32 %s15, %s27
      %s83 = ssub.s32 %s16, %s23
      %s84 = sor.u32 %s82, %s83
      %p85 = scmp.eq.s32.totalorder %s84, 0
      %s87 = sadd.s32 %s86, 1
      %s88 = scalar_select %p85, %s86, %s87
      %p91 = pneg %p85
      %p92 = scmp.eq.s32.totalorder %s8, 1
      %p93 = por %p91, %p92
      %p94 = scmp.ne.s32.totalorder %s86, %s89
      %p95 = scmp.eq.s32.totalorder %s8, 0
      %p96 = por %p94, %p95
      %p97 = scmp.ne.s32.totalorder %s86, %s89
      %p98 = scmp.eq.s32.totalorder %s13, 1
      %p99 = por %p97, %p98
      %p100 = scmp.ne.s32.totalorder %s89, %s90
      %p101 = scmp.eq.s32.totalorder %s13, 0
      %p102 = por %p100, %p101
      %p103 = scmp.ne.s32.totalorder %s89, %s90
      %p104 = scmp.eq.s32.totalorder %s14, 1
      %p105 = por %p103, %p104
      %p107 = scmp.ne.s32.totalorder %s90, %s106
      %p108 = scmp.eq.s32.totalorder %s14, 0
      %p109 = por %p107, %p108
      %p110 = scmp.le.s32.totalorder 1, %s8
      %p111 = scmp.lt.s32.totalorder %s8, 3
      %p112 = pnand %p110, %p111
      %p113 = pneg %p112
      // Predicated region
      $region9: #{dyrelu_forward.3} parent=5 // pred_check
        _
      $region10: #{dyrelu_forward.3} parent=5 // pred_check_branch
        %115 = sbr.rel (%p112) target = $region12
      $region11: #{dyrelu_forward.3} parent=5 // pred_region
        %s116 = ssub.s32 %s8, 1
      $region12: #{dyrelu_forward.3} parent=5 // pred_fallthru
        _
      %p117 = scmp.lt.s32.totalorder %s8, 2
      // Predicated region
      $region13: #{dyrelu_forward.3} parent=5 // pred_check
        %p118 = pneg %p117
      $region14: #{dyrelu_forward.3} parent=5 // pred_check_branch
        %120 = sbr.rel (%p118) target = $region16
      $region15: #{dyrelu_forward.3} parent=5 // pred_region
        // Predicated region
        $region17: #{dyrelu_forward.3} parent=15 // pred_check
          %p121 = pneg %p42
        $region18: #{dyrelu_forward.3} parent=15 // pred_check_branch
          %123 = sbr.rel (%p121) target = $region20
        $region19: #{dyrelu_forward.3} parent=15 // pred_region
          %s124 = smul.u32 2, %s16
          %p125 = scmp.lt.s32.totalorder %s15, 1
          %s126 = scalar_select %p125, %s15, 1
          %p127 = scmp.lt.s32.totalorder %s124, 1
          %s128 = scalar_select %p127, %s124, 1
          %s129 = smul.addr %s126, 2
          %s130 = sadd.s32 %s128, %s129
          %s131 = smul.addr %s130, 8
          %s132 = scalar_lea.vmem %s0, %s131
          %s133 = smul.u32 2, %s16
        $region20: #{dyrelu_forward.3} parent=15 // pred_fallthru
          _
        // Predicated region
        $region21: #{dyrelu_forward.3} parent=15 // pred_check
          %p134 = pneg %p68
        $region22: #{dyrelu_forward.3} parent=15 // pred_check_branch
          %136 = sbr.rel (%p134) target = $region24
        $region23: #{dyrelu_forward.3} parent=15 // pred_region
          %s137 = sand.u32 %s58, 1
          %s138 = sand.u32 %s58, 1
          %s139 = smul.addr %s138, 32
          %s140 = scalar_lea.vmem [#allocation2], %s139
          %s141 = smul.addr %s15, 8
          %s142 = scalar_lea.vmem %s1, %s141
          // Predicated region
          $region25: #{dyrelu_forward.3} parent=23 // pred_check
            _
          $region26: #{dyrelu_forward.3} parent=23 // pred_check_branch
            %144 = sbr.rel (0) target = $region28
          $region27: #{dyrelu_forward.3} parent=23 // pred_region
            // Predicated region
            $region29: #{dyrelu_forward.3} parent=27 // pred_check
              _
            $region30: #{dyrelu_forward.3} parent=27 // pred_check_branch
              %146 = sbr.rel (0) target = $region32
            $region31: #{dyrelu_forward.3} parent=27 // pred_region
              // Predicated region
              $region44: #{dyrelu_forward.3} parent=31 // pred_check
                _
              $region45: #{dyrelu_forward.3} parent=31 // pred_check_branch
                %168 = sbr.rel (0) target = $region47
              $region46: #{dyrelu_forward.3} parent=31 // pred_region
                loop: start=0, step=1, limit=1
                $region48: #{dyrelu_forward.3} parent=46 // loop_pre_header
                  _
                $region49: #{dyrelu_forward.3} parent=46 // loop_header
                  %s170 = sphi 0, %s174
                  %p171 = scmp.ge.s32.totalorder %s170, 1
                  %s175 = sphi %s142, %s142
                  %s176 = sphi %s140, %s140
                $region50: #{dyrelu_forward.3} parent=46 // loop_header_branch
                  %173 = sbr.rel (%p171) target = $region54
                $region51: #{dyrelu_forward.3} parent=46 // loop_body
                  %v177 = vld [vmem:[%s175] sm:$0xff]
                  %178 = vst [vmem:[%s176] sm:$0xff] %v177
                  %v179 = vld [vmem:[%s175 + $0x10] sm:$0xff]
                  %180 = vst [vmem:[%s176 + $0x8] sm:$0xff] %v179
                  %v181 = vld [vmem:[%s175 + $0x20] sm:$0xff]
                  %182 = vst [vmem:[%s176 + $0x10] sm:$0xff] %v181
                  %v183 = vld [vmem:[%s175 + $0x30] sm:$0xff]
                  %184 = vst [vmem:[%s176 + $0x18] sm:$0xff] %v183
                $region52: #{dyrelu_forward.3} parent=46 // loop_footer
                  %s174 = sadd.s32 1, %s170
                $region53: #{dyrelu_forward.3} parent=46 // loop_footer_branch
                  %169 = sbr.rel target = $region49
                $region54: #{dyrelu_forward.3} parent=46 // loop_exit
                  _
              $region47: #{dyrelu_forward.3} parent=31 // pred_fallthru
                _
              // Predicated region
              $region55: #{dyrelu_forward.3} parent=31 // pred_check
                _
              $region56: #{dyrelu_forward.3} parent=31 // pred_check_branch
                %186 = sbr.rel target = $region58
              $region57: #{dyrelu_forward.3} parent=31 // pred_region
                _
              $region58: #{dyrelu_forward.3} parent=31 // pred_fallthru
                _
            $region32: #{dyrelu_forward.3} parent=27 // pred_fallthru
              _
            // Predicated region
            $region33: #{dyrelu_forward.3} parent=27 // pred_check
              _
            $region34: #{dyrelu_forward.3} parent=27 // pred_check_branch
              %148 = sbr.rel target = $region36
            $region35: #{dyrelu_forward.3} parent=27 // pred_region
              %s150 = ssub.s32 256, 1
              loop: start=0, step=1, limit=1
              $region37: #{dyrelu_forward.3} parent=35 // loop_pre_header
                _
              $region38: #{dyrelu_forward.3} parent=35 // loop_header
                %s152 = sphi 0, %s156
                %p153 = scmp.ge.s32.totalorder %s152, 1
                %s157 = sphi %s142, %s142
                %s158 = sphi %s140, %s140
              $region39: #{dyrelu_forward.3} parent=35 // loop_header_branch
                %155 = sbr.rel (%p153) target = $region43
              $region40: #{dyrelu_forward.3} parent=35 // loop_body
                %v159 = vld [vmem:[%s157] sm:%s150]
                %160 = vst [vmem:[%s158] sm:%s150] %v159
                %v161 = vld [vmem:[%s157 + $0x10] sm:%s150]
                %162 = vst [vmem:[%s158 + $0x8] sm:%s150] %v161
                %v163 = vld [vmem:[%s157 + $0x20] sm:%s150]
                %164 = vst [vmem:[%s158 + $0x10] sm:%s150] %v163
                %v165 = vld [vmem:[%s157 + $0x30] sm:%s150]
                %166 = vst [vmem:[%s158 + $0x18] sm:%s150] %v165
              $region41: #{dyrelu_forward.3} parent=35 // loop_footer
                %s156 = sadd.s32 1, %s152
              $region42: #{dyrelu_forward.3} parent=35 // loop_footer_branch
                %151 = sbr.rel target = $region38
              $region43: #{dyrelu_forward.3} parent=35 // loop_exit
                _
            $region36: #{dyrelu_forward.3} parent=27 // pred_fallthru
              _
          $region28: #{dyrelu_forward.3} parent=23 // pred_fallthru
            _
          %187 = vnop
        $region24: #{dyrelu_forward.3} parent=15 // pred_fallthru
          _
      $region16: #{dyrelu_forward.3} parent=5 // pred_fallthru
        _
      %p188 = scmp.le.s32.totalorder 1, %s8
      %p189 = scmp.lt.s32.totalorder %s8, 3
      %p190 = pnand %p188, %p189
      %p191 = pneg %p190
      // Predicated region
      $region59: #{dyrelu_forward.3} parent=5 // pred_check
        _
      $region60: #{dyrelu_forward.3} parent=5 // pred_check_branch
        %193 = sbr.rel (%p190) target = $region62
      $region61: #{dyrelu_forward.3} parent=5 // pred_region
        %s194 = ssub.s32 %s8, 1
        %s195 = sand.u32 %s61, 1
        %s196 = sand.u32 %s61, 1
        %s197 = smul.addr %s196, 32
        %s198 = scalar_lea.vmem [#allocation2], %s197
        // Predicated region
        $region63: #{dyrelu_forward.3} parent=61 // pred_check
          %p199 = pneg %p74
        $region64: #{dyrelu_forward.3} parent=61 // pred_check_branch
          %201 = sbr.rel (%p199) target = $region66
        $region65: #{dyrelu_forward.3} parent=61 // pred_region
          _
        $region66: #{dyrelu_forward.3} parent=61 // pred_fallthru
          _
        %s202 = smul.u32 2, %s18
        %p203 = scmp.lt.s32.totalorder %s17, 1
        %s204 = scalar_select %p203, %s17, 1
        %p205 = scmp.lt.s32.totalorder %s202, 1
        %s206 = scalar_select %p205, %s202, 1
        %s207 = smul.addr %s204, 2
        %s208 = sadd.s32 %s206, %s207
        %s209 = smul.addr %s208, 8
        %s210 = scalar_lea.vmem %s0, %s209
        %p211 = pneg %p48
        %p212 = pneg %p45
        %s213 = sand.u32 %s61, 1
        %s214 = sand.u32 %s61, 1
        %s215 = smul.addr %s214, 32
        %s216 = scalar_lea.vmem [#allocation2], %s215
        %p217 = pneg %p74
        %p218 = pneg %p71
        %p219 = pneg %p102
        %p220 = pneg %p99
        %s221 = smul.u32 2, %s18
        %p222 = scmp.lt.s32.totalorder %s17, 1
        %s223 = scalar_select %p222, %s17, 1
        %p224 = scmp.lt.s32.totalorder %s221, 1
        %s225 = scalar_select %p224, %s221, 1
        %s226 = smul.addr %s223, 2
        %s227 = sadd.s32 %s225, %s226
        %s228 = smul.addr %s227, 8
        %s229 = scalar_lea.vmem %s2, %s228
        %s230 = smul.u32 2, %s18
        %p231 = scmp.lt.s32.totalorder %s17, 1
        %s232 = scalar_select %p231, %s17, 1
        %p233 = scmp.lt.s32.totalorder %s230, 1
        %s234 = scalar_select %p233, %s230, 1
        %s235 = smul.addr %s232, 2
        %s236 = sadd.s32 %s234, %s235
        %s237 = smul.addr %s236, 8
        %s238 = scalar_lea.vmem %s0, %s237
        %s239 = smul.u32 2, %s18
        %s240 = smul.u32 2, %s18
        %p241 = scmp.lt.s32.totalorder %s17, 1
        %s242 = scalar_select %p241, %s17, 1
        %p243 = scmp.lt.s32.totalorder %s240, 1
        %s244 = scalar_select %p243, %s240, 1
        %s245 = smul.addr %s242, 2
        %s246 = sadd.s32 %s244, %s245
        %s247 = smul.addr %s246, 8
        %s248 = scalar_lea.vmem %s2, %s247
        %s249 = smul.u32 2, %s18
        %v250 = vld [vmem:[%s238] sm:$0xff]
        %v251 = vld [vmem:[%s238 + $0x8] sm:$0xff]
        %v252 = vld [vmem:[%s198] sm:$0xff]
        %s253 = scalar_lea.vmem %s198, 8 [#allocation2]
        %v254 = vld [vmem:[%s253] sm:$0xff]
        %s255 = scalar_lea.vmem %s198, 16 [#allocation2]
        %v256 = vld [vmem:[%s255] sm:$0xff]
        %s257 = scalar_lea.vmem %s198, 24 [#allocation2]
        %v258 = vld [vmem:[%s257] sm:$0xff]
        %260 = vset.pattern.permute.xlu0 0
        %261 = vperm.xlu0 %260, %v252
        %v262 = vpop.permute.xlu0 %261
        %v264 = vmul.f32 %v250, %v262
        %v265 = vmul.f32 %v251, %v262
        %267 = vset.pattern.permute.xlu0 0
        %268 = vperm.xlu0 %267, %v254
        %v269 = vpop.permute.xlu0 %268
        %v271 = vadd.f32 %v264, %v269
        %v272 = vadd.f32 %v265, %v269
        %274 = vset.pattern.permute.xlu0 0
        %275 = vperm.xlu0 %274, %v256
        %v276 = vpop.permute.xlu0 %275
        %v278 = vmul.f32 %v250, %v276
        %v279 = vmul.f32 %v251, %v276
        %281 = vset.pattern.permute.xlu0 0
        %282 = vperm.xlu0 %281, %v258
        %v283 = vpop.permute.xlu0 %282
        %v285 = vadd.f32 %v278, %v283
        %v286 = vadd.f32 %v279, %v283
        %v287 = vmax.f32 %v271, %v285
        %v288 = vmax.f32 %v272, %v286
        %289 = vst [vmem:[%s248] sm:$0xff] %v287
        %290 = vst [vmem:[%s248 + $0x8] sm:$0xff] %v288
        %s291 = smul.u32 2, %s18
        %p292 = scmp.lt.s32.totalorder %s17, 1
        %s293 = scalar_select %p292, %s17, 1
        %p294 = scmp.lt.s32.totalorder %s291, 1
        %s295 = scalar_select %p294, %s291, 1
        %s296 = smul.addr %s293, 2
        %s297 = sadd.s32 %s295, %s296
        %s298 = smul.addr %s297, 8
        %s299 = scalar_lea.vmem %s2, %s298
        // Predicated region
        $region67: #{dyrelu_forward.3} parent=61 // pred_check
          %p300 = pneg %p99
        $region68: #{dyrelu_forward.3} parent=61 // pred_check_branch
          %302 = sbr.rel (%p300) target = $region70
        $region69: #{dyrelu_forward.3} parent=61 // pred_region
          %s303 = smul.u32 2, %s18
        $region70: #{dyrelu_forward.3} parent=61 // pred_fallthru
          _
      $region62: #{dyrelu_forward.3} parent=5 // pred_fallthru
        _
      %p304 = scmp.le.s32.totalorder 2, %s8
      // Predicated region
      $region71: #{dyrelu_forward.3} parent=5 // pred_check
        %p305 = pneg %p304
      $region72: #{dyrelu_forward.3} parent=5 // pred_check_branch
        %307 = sbr.rel (%p305) target = $region74
      $region73: #{dyrelu_forward.3} parent=5 // pred_region
        %s308 = ssub.s32 %s8, 2
        // Predicated region
        $region75: #{dyrelu_forward.3} parent=73 // pred_check
          %p309 = pneg %p105
        $region76: #{dyrelu_forward.3} parent=73 // pred_check_branch
          %311 = sbr.rel (%p309) target = $region78
        $region77: #{dyrelu_forward.3} parent=73 // pred_region
          %s312 = smul.u32 2, %s20
          %p313 = scmp.lt.s32.totalorder %s19, 1
          %s314 = scalar_select %p313, %s19, 1
          %p315 = scmp.lt.s32.totalorder %s312, 1
          %s316 = scalar_select %p315, %s312, 1
          %s317 = smul.addr %s314, 2
          %s318 = sadd.s32 %s316, %s317
          %s319 = smul.addr %s318, 8
          %s320 = scalar_lea.vmem %s2, %s319
        $region78: #{dyrelu_forward.3} parent=73 // pred_fallthru
          _
      $region74: #{dyrelu_forward.3} parent=5 // pred_fallthru
        _
    $region6: #{dyrelu_forward.3} parent=1 // loop_footer
      %s12 = sadd.s32 1, %s8
    $region7: #{dyrelu_forward.3} parent=1 // loop_footer_branch
      %7 = sbr.rel target = $region3
    $region8: #{dyrelu_forward.3} parent=1 // loop_exit
      _

// kernel: dyrelu_forward.2
$region0: #{dyrelu_forward.2}
  #allocation0 [shape = 'u32[]', space=smem, size = 0x4, offset = 0x4, fixed_abs, tag = 'smem constant byte address 0x4 - core index']
  #allocation1 [shape = 'u32[144,128]{1,0:T(1,128)}', space=vmem, size = 0x12000, scoped, tag = 'internal scratch']
  #allocation2 [shape = 'f32[2,8,128]{2,1,0:T(8,128)}', space=vmem, size = 0x2000, scoped, tag = 'scratch operand']
  %s0 = inlined_call_operand.vmem [shape: f32[2,8,256], index: 0, kind: input, shape index: {}]
  %s1 = inlined_call_operand.vmem [shape: f32[8,2], index: 1, kind: input, shape index: {}]
  %s2 = inlined_call_operand.vmem [shape: f32[1,2], index: 2, kind: input, shape index: {}]
  %s3 = inlined_call_operand.vmem [shape: f32[4,2,8], index: 3, kind: input, shape index: {}]
  %s4 = inlined_call_operand.vmem [shape: f32[4,1,8], index: 4, kind: input, shape index: {}]
  %s5 = inlined_call_operand.vmem [shape: f32[4,2,8], index: 5, kind: output, shape index: {}]
  %s6 = sld [smem:[#allocation0]]
  $region38: #{dyrelu_forward.2} parent=0
    _
  %s8 = ssub.s32 1, %s6
  %s9 = scalar_select 0, %s8, %s6
  // Predicated region
  $region2: #{dyrelu_forward.2} parent=0 // pred_check
    _
  $region3: #{dyrelu_forward.2} parent=0 // pred_check_branch
    %11 = sbr.rel (0) target = $region5
  $region4: #{dyrelu_forward.2} parent=0 // pred_region
    _
  $region5: #{dyrelu_forward.2} parent=0 // pred_fallthru
    _
  // Predicated region
  $region6: #{dyrelu_forward.2} parent=0 // pred_check
    _
  $region7: #{dyrelu_forward.2} parent=0 // pred_check_branch
    %13 = sbr.rel (0) target = $region9
  $region8: #{dyrelu_forward.2} parent=0 // pred_region
    _
  $region9: #{dyrelu_forward.2} parent=0 // pred_fallthru
    _
  // Predicated region
  $region10: #{dyrelu_forward.2} parent=0 // pred_check
    _
  $region11: #{dyrelu_forward.2} parent=0 // pred_check_branch
    %15 = sbr.rel (0) target = $region13
  $region12: #{dyrelu_forward.2} parent=0 // pred_region
    _
  $region13: #{dyrelu_forward.2} parent=0 // pred_fallthru
    _
  // Predicated region
  $region14: #{dyrelu_forward.2} parent=0 // pred_check
    _
  $region15: #{dyrelu_forward.2} parent=0 // pred_check_branch
    %17 = sbr.rel (0) target = $region17
  $region16: #{dyrelu_forward.2} parent=0 // pred_region
    _
  $region17: #{dyrelu_forward.2} parent=0 // pred_fallthru
    _
  // Predicated region
  $region18: #{dyrelu_forward.2} parent=0 // pred_check
    _
  $region19: #{dyrelu_forward.2} parent=0 // pred_check_branch
    %19 = sbr.rel (0) target = $region21
  $region20: #{dyrelu_forward.2} parent=0 // pred_region
    _
  $region21: #{dyrelu_forward.2} parent=0 // pred_fallthru
    _
  %p20 = scmp.eq.s32.totalorder 0, 0
  // Predicated region
  $region22: #{dyrelu_forward.2} parent=0 // pred_check
    %p21 = pneg %p20
  $region23: #{dyrelu_forward.2} parent=0 // pred_check_branch
    %23 = sbr.rel (%p21) target = $region25
  $region24: #{dyrelu_forward.2} parent=0 // pred_region
    %24 = vst [vmem:[#allocation2] sm:$0xff] 0.0
    %25 = vst [vmem:[#allocation2 + $0x8] sm:$0xff] 0.0
  $region25: #{dyrelu_forward.2} parent=0 // pred_fallthru
    _
  %v26 = vld [vmem:[%s0] sm:$0xff]
  %v27 = vld [vmem:[%s0 + $0x8] sm:$0xff]
  %v28 = vld [vmem:[%s0 + $0x10] sm:$0xff]
  %v29 = vld [vmem:[%s0 + $0x18] sm:$0xff]
  %v30 = vadd.f32 %v26, %v27
  %v31 = vadd.f32 %v28, %v29
  %v32 = vld [vmem:[#allocation2] sm:$0xff]
  %v33 = vld [vmem:[#allocation2 + $0x8] sm:$0xff]
  %v34 = vadd.f32 %v32, %v30
  %v35 = vadd.f32 %v33, %v31
  %36 = vst [vmem:[#allocation2] sm:$0xff] %v34
  %37 = vst [vmem:[#allocation2 + $0x8] sm:$0xff] %v35
  // Predicated region
  $region26: #{dyrelu_forward.2} parent=0 // pred_check
    %p38 = pneg %p20
  $region27: #{dyrelu_forward.2} parent=0 // pred_check_branch
    %40 = sbr.rel (%p38) target = $region29
  $region28: #{dyrelu_forward.2} parent=0 // pred_region
    %v41 = vld [vmem:[#allocation2] sm:$0xff]
    %v42 = vld [vmem:[#allocation2 + $0x8] sm:$0xff]
    %43 = vadd.xlane.f32.xlu0 %v41
    %v44 = vpop.xlane.xlu0 %43
    %45 = vadd.xlane.f32.xlu0 %v42
    %v46 = vpop.xlane.xlu0 %45
    %v47 = vmul.f32 %v44, 0.00390625
    %v48 = vmul.f32 %v46, 0.00390625
    %v49 = vld [vmem:[%s1] sm:$0xff]
    %v50 = vld [vmem:[%s2] sm:$0x1]
    %v52 = vlaneseq
    %v53 = vshrl.u32 %v52, 7
    %v54 = vsub.s32 0, %v53
    %v55 = vrot.slane %v50, %v54
    %v59 = vlaneseq
    %v60 = vand.u32 %v59, 127
    %v61 = vlaneseq
    %v62 = vshrl.u32 %v61, 7
    %v63 = vsub.s32 %v60, %v62
    %v64 = vrot.slane %v47, %v63
    %v65 = vlaneseq
    %v66 = vshrl.u32 %v65, 7
    %v67 = vsub.s32 %v60, %v66
    %v68 = vrot.slane %v48, %v67
    %vm69 = vcmask 1041409
    %v70 = vsel %vm69, %v68, %v64
    %vm71 = vcmask 64512
    %v72 = vsel %vm71, %v70, 0
    %74 = vmatprep.subr.mxu0 0.0
    %75 = vmatpush1.msra.mxu0 0.0
    %76 = vmatprep.subr.mxu0 0.0
    %77 = vmatpush1.msra.mxu0 0.0
    %78 = vmatprep.subr.mxu0 0.0
    %79 = vmatpush1.msra.mxu0 0.0
    %80 = vmatprep.subr.mxu0 0.0
    %81 = vmatpush1.msra.mxu0 0.0
    %82 = vmatprep.subr.mxu0 0.0
    %83 = vmatpush1.msra.mxu0 0.0
    %84 = vmatprep.subr.mxu0 0.0
    %85 = vmatpush1.msra.mxu0 0.0
    %86 = vmatprep.subr.mxu0 0.0
    %87 = vmatpush1.msra.mxu0 0.0
    %88 = vmatprep.subr.mxu0 0.0
    %89 = vmatpush1.msra.mxu0 0.0
    %90 = vmatprep.subr.mxu0 0.0
    %91 = vmatpush1.msra.mxu0 0.0
    %92 = vmatprep.subr.mxu0 0.0
    %93 = vmatpush1.msra.mxu0 0.0
    %94 = vmatprep.subr.mxu0 0.0
    %95 = vmatpush1.msra.mxu0 0.0
    %96 = vmatprep.subr.mxu0 0.0
    %97 = vmatpush1.msra.mxu0 0.0
    %98 = vmatprep.subr.mxu0 0.0
    %99 = vmatpush1.msra.mxu0 0.0
    %100 = vmatprep.subr.mxu0 0.0
    %101 = vmatpush1.msra.mxu0 0.0
    %102 = vmatprep.subr.mxu0 0.0
    %103 = vmatpush1.msra.mxu0 0.0
    %104 = vmatprep.subr.mxu0 0.0
    %105 = vmatpush1.msra.mxu0 %v49
    %106 = vmatprep.subr.mxu0 0.0
    %107 = vmatpush2.msra.mxu0 0.0
    %108 = vmatprep.subr.mxu0 0.0
    %109 = vmatpush2.msra.mxu0 0.0
    %110 = vmatprep.subr.mxu0 0.0
    %111 = vmatpush2.msra.mxu0 0.0
    %112 = vmatprep.subr.mxu0 0.0
    %113 = vmatpush2.msra.mxu0 0.0
    %114 = vmatprep.subr.mxu0 0.0
    %115 = vmatpush2.msra.mxu0 0.0
    %116 = vmatprep.subr.mxu0 0.0
    %117 = vmatpush2.msra.mxu0 0.0
    %118 = vmatprep.subr.mxu0 0.0
    %119 = vmatpush2.msra.mxu0 0.0
    %120 = vmatprep.subr.mxu0 0.0
    %121 = vmatpush2.msra.mxu0 0.0
    %122 = vmatprep.subr.mxu0 0.0
    %123 = vmatpush2.msra.mxu0 0.0
    %124 = vmatprep.subr.mxu0 0.0
    %125 = vmatpush2.msra.mxu0 0.0
    %126 = vmatprep.subr.mxu0 0.0
    %127 = vmatpush2.msra.mxu0 0.0
    %128 = vmatprep.subr.mxu0 0.0
    %129 = vmatpush2.msra.mxu0 0.0
    %130 = vmatprep.subr.mxu0 0.0
    %131 = vmatpush2.msra.mxu0 0.0
    %132 = vmatprep.subr.mxu0 0.0
    %133 = vmatpush2.msra.mxu0 0.0
    %134 = vmatprep.subr.mxu0 0.0
    %135 = vmatpush2.msra.mxu0 0.0
    %136 = vmatprep.subr.mxu0 0.0
    %137 = vmatpush2.msra.mxu0 0.0
    %138 = vmatprep.mubr.f32.mxu0 0.0
    %139 = vmatmul.mubr.f32.gmra.mxu0 %v72
    %v140 = vpop.f32.mrf.mxu0
    %v141 = vadd.f32 %v55, %v140
    %v142 = vpop.f32.mrf.mxu0
    %143 = vdwg.mxu0
    %v144 = vmax.f32 %v141, 0.0
    %v145 = vld [vmem:[%s3] sm:$0x3]
    %v146 = vld [vmem:[%s4] sm:$0x1]
    %v148 = vlaneseq
    %v149 = vshrl.u32 %v148, 7
    %v150 = vsub.s32 0, %v149
    %v151 = vrot.slane %v146, %v150
    %vm153 = vcmask 15360
    %v155 = vsel %vm153, %v144, 0
    %vm157 = vcmask 1041408
    %v159 = vsel %vm157, %v145, 0
    %161 = vmatprep.subr.mxu0 0.0
    %162 = vmatpush1.msra.mxu0 0.0
    %163 = vmatprep.subr.mxu0 0.0
    %164 = vmatpush1.msra.mxu0 0.0
    %165 = vmatprep.subr.mxu0 0.0
    %166 = vmatpush1.msra.mxu0 0.0
    %167 = vmatprep.subr.mxu0 0.0
    %168 = vmatpush1.msra.mxu0 0.0
    %169 = vmatprep.subr.mxu0 0.0
    %170 = vmatpush1.msra.mxu0 0.0
    %171 = vmatprep.subr.mxu0 0.0
    %172 = vmatpush1.msra.mxu0 0.0
    %173 = vmatprep.subr.mxu0 0.0
    %174 = vmatpush1.msra.mxu0 0.0
    %175 = vmatprep.subr.mxu0 0.0
    %176 = vmatpush1.msra.mxu0 0.0
    %177 = vmatprep.subr.mxu0 0.0
    %178 = vmatpush1.msra.mxu0 0.0
    %179 = vmatprep.subr.mxu0 0.0
    %180 = vmatpush1.msra.mxu0 0.0
    %181 = vmatprep.subr.mxu0 0.0
    %182 = vmatpush1.msra.mxu0 0.0
    %183 = vmatprep.subr.mxu0 0.0
    %184 = vmatpush1.msra.mxu0 0.0
    %185 = vmatprep.subr.mxu0 0.0
    %186 = vmatpush1.msra.mxu0 0.0
    %187 = vmatprep.subr.mxu0 0.0
    %188 = vmatpush1.msra.mxu0 0.0
    %189 = vmatprep.subr.mxu0 0.0
    %190 = vmatpush1.msra.mxu0 0.0
    %191 = vmatprep.subr.mxu0 0.0
    %192 = vmatpush1.msra.mxu0 %v159
    %193 = vmatprep.subr.mxu0 0.0
    %194 = vmatpush2.msra.mxu0 0.0
    %195 = vmatprep.subr.mxu0 0.0
    %196 = vmatpush2.msra.mxu0 0.0
    %197 = vmatprep.subr.mxu0 0.0
    %198 = vmatpush2.msra.mxu0 0.0
    %199 = vmatprep.subr.mxu0 0.0
    %200 = vmatpush2.msra.mxu0 0.0
    %201 = vmatprep.subr.mxu0 0.0
    %202 = vmatpush2.msra.mxu0 0.0
    %203 = vmatprep.subr.mxu0 0.0
    %204 = vmatpush2.msra.mxu0 0.0
    %205 = vmatprep.subr.mxu0 0.0
    %206 = vmatpush2.msra.mxu0 0.0
    %207 = vmatprep.subr.mxu0 0.0
    %208 = vmatpush2.msra.mxu0 0.0
    %209 = vmatprep.subr.mxu0 0.0
    %210 = vmatpush2.msra.mxu0 0.0
    %211 = vmatprep.subr.mxu0 0.0
    %212 = vmatpush2.msra.mxu0 0.0
    %213 = vmatprep.subr.mxu0 0.0
    %214 = vmatpush2.msra.mxu0 0.0
    %215 = vmatprep.subr.mxu0 0.0
    %216 = vmatpush2.msra.mxu0 0.0
    %217 = vmatprep.subr.mxu0 0.0
    %218 = vmatpush2.msra.mxu0 0.0
    %219 = vmatprep.subr.mxu0 0.0
    %220 = vmatpush2.msra.mxu0 0.0
    %221 = vmatprep.subr.mxu0 0.0
    %222 = vmatpush2.msra.mxu0 0.0
    %223 = vmatprep.subr.mxu0 0.0
    %224 = vmatpush2.msra.mxu0 0.0
    %225 = vmatprep.mubr.f32.mxu0 0.0
    %226 = vmatmul.mubr.f32.gmra.mxu0 %v155
    %v227 = vpop.f32.mrf.mxu0
    %v228 = vadd.f32 %v151, %v227
    %v229 = vpop.f32.mrf.mxu0
    %230 = vdwg.mxu0
    %v231 = vadd.f32 %v228, 3.0
    %v232 = vmax.f32 %v231, 0.0
    %v233 = vmin.f32 %v232, 6.0
    %v234 = vmul.f32 %v233, 0.16666667
    %v235 = vsub.f32 %v234, 0.5
    %v236 = vmul.f32 %v235, 2.0
    %v237 = vadd.f32 %v236, 1.0
    %vm238 = vcmask 58368
    %239 = vst.msk [vmem:[%s5] sm:$0x3] %vm238, %v237
    %s240 = scalar_lea.vmem %s3, 2
    %v241 = vld [vmem:[%s240] sm:$0x3]
    %s242 = scalar_lea.vmem %s4, 1
    %v243 = vld [vmem:[%s242] sm:$0x1]
    %v245 = vlaneseq
    %v246 = vshrl.u32 %v245, 7
    %v247 = vsub.s32 0, %v246
    %v248 = vrot.slane %v243, %v247
    %v251 = vsel %vm157, %v241, 0
    %253 = vmatprep.subr.mxu0 0.0
    %254 = vmatpush1.msra.mxu0 0.0
    %255 = vmatprep.subr.mxu0 0.0
    %256 = vmatpush1.msra.mxu0 0.0
    %257 = vmatprep.subr.mxu0 0.0
    %258 = vmatpush1.msra.mxu0 0.0
    %259 = vmatprep.subr.mxu0 0.0
    %260 = vmatpush1.msra.mxu0 0.0
    %261 = vmatprep.subr.mxu0 0.0
    %262 = vmatpush1.msra.mxu0 0.0
    %263 = vmatprep.subr.mxu0 0.0
    %264 = vmatpush1.msra.mxu0 0.0
    %265 = vmatprep.subr.mxu0 0.0
    %266 = vmatpush1.msra.mxu0 0.0
    %267 = vmatprep.subr.mxu0 0.0
    %268 = vmatpush1.msra.mxu0 0.0
    %269 = vmatprep.subr.mxu0 0.0
    %270 = vmatpush1.msra.mxu0 0.0
    %271 = vmatprep.subr.mxu0 0.0
    %272 = vmatpush1.msra.mxu0 0.0
    %273 = vmatprep.subr.mxu0 0.0
    %274 = vmatpush1.msra.mxu0 0.0
    %275 = vmatprep.subr.mxu0 0.0
    %276 = vmatpush1.msra.mxu0 0.0
    %277 = vmatprep.subr.mxu0 0.0
    %278 = vmatpush1.msra.mxu0 0.0
    %279 = vmatprep.subr.mxu0 0.0
    %280 = vmatpush1.msra.mxu0 0.0
    %281 = vmatprep.subr.mxu0 0.0
    %282 = vmatpush1.msra.mxu0 0.0
    %283 = vmatprep.subr.mxu0 0.0
    %284 = vmatpush1.msra.mxu0 %v251
    %285 = vmatprep.subr.mxu0 0.0
    %286 = vmatpush2.msra.mxu0 0.0
    %287 = vmatprep.subr.mxu0 0.0
    %288 = vmatpush2.msra.mxu0 0.0
    %289 = vmatprep.subr.mxu0 0.0
    %290 = vmatpush2.msra.mxu0 0.0
    %291 = vmatprep.subr.mxu0 0.0
    %292 = vmatpush2.msra.mxu0 0.0
    %293 = vmatprep.subr.mxu0 0.0
    %294 = vmatpush2.msra.mxu0 0.0
    %295 = vmatprep.subr.mxu0 0.0
    %296 = vmatpush2.msra.mxu0 0.0
    %297 = vmatprep.subr.mxu0 0.0
    %298 = vmatpush2.msra.mxu0 0.0
    %299 = vmatprep.subr.mxu0 0.0
    %300 = vmatpush2.msra.mxu0 0.0
    %301 = vmatprep.subr.mxu0 0.0
    %302 = vmatpush2.msra.mxu0 0.0
    %303 = vmatprep.subr.mxu0 0.0
    %304 = vmatpush2.msra.mxu0 0.0
    %305 = vmatprep.subr.mxu0 0.0
    %306 = vmatpush2.msra.mxu0 0.0
    %307 = vmatprep.subr.mxu0 0.0
    %308 = vmatpush2.msra.mxu0 0.0
    %309 = vmatprep.subr.mxu0 0.0
    %310 = vmatpush2.msra.mxu0 0.0
    %311 = vmatprep.subr.mxu0 0.0
    %312 = vmatpush2.msra.mxu0 0.0
    %313 = vmatprep.subr.mxu0 0.0
    %314 = vmatpush2.msra.mxu0 0.0
    %315 = vmatprep.subr.mxu0 0.0
    %316 = vmatpush2.msra.mxu0 0.0
    %317 = vmatprep.mubr.f32.mxu0 0.0
    %318 = vmatmul.mubr.f32.gmra.mxu0 %v155
    %v319 = vpop.f32.mrf.mxu0
    %v320 = vadd.f32 %v248, %v319
    %v321 = vpop.f32.mrf.mxu0
    %322 = vdwg.mxu0
    %v323 = vadd.f32 %v320, 3.0
    %v324 = vmax.f32 %v323, 0.0
    %v325 = vmin.f32 %v324, 6.0
    %v326 = vmul.f32 %v325, 0.16666667
    %v327 = vsub.f32 %v326, 0.5
    %v328 = vadd.f32 %v327, 0.0
    %s329 = scalar_lea.vmem %s5, 2
    %330 = vst.msk [vmem:[%s329] sm:$0x3] %vm238, %v328
    %s331 = scalar_lea.vmem %s3, 4
    %v332 = vld [vmem:[%s331] sm:$0x3]
    %s333 = scalar_lea.vmem %s4, 2
    %v334 = vld [vmem:[%s333] sm:$0x1]
    %v336 = vlaneseq
    %v337 = vshrl.u32 %v336, 7
    %v338 = vsub.s32 0, %v337
    %v339 = vrot.slane %v334, %v338
    %v342 = vsel %vm157, %v332, 0
    %344 = vmatprep.subr.mxu0 0.0
    %345 = vmatpush1.msra.mxu0 0.0
    %346 = vmatprep.subr.mxu0 0.0
    %347 = vmatpush1.msra.mxu0 0.0
    %348 = vmatprep.subr.mxu0 0.0
    %349 = vmatpush1.msra.mxu0 0.0
    %350 = vmatprep.subr.mxu0 0.0
    %351 = vmatpush1.msra.mxu0 0.0
    %352 = vmatprep.subr.mxu0 0.0
    %353 = vmatpush1.msra.mxu0 0.0
    %354 = vmatprep.subr.mxu0 0.0
    %355 = vmatpush1.msra.mxu0 0.0
    %356 = vmatprep.subr.mxu0 0.0
    %357 = vmatpush1.msra.mxu0 0.0
    %358 = vmatprep.subr.mxu0 0.0
    %359 = vmatpush1.msra.mxu0 0.0
    %360 = vmatprep.subr.mxu0 0.0
    %361 = vmatpush1.msra.mxu0 0.0
    %362 = vmatprep.subr.mxu0 0.0
    %363 = vmatpush1.msra.mxu0 0.0
    %364 = vmatprep.subr.mxu0 0.0
    %365 = vmatpush1.msra.mxu0 0.0
    %366 = vmatprep.subr.mxu0 0.0
    %367 = vmatpush1.msra.mxu0 0.0
    %368 = vmatprep.subr.mxu0 0.0
    %369 = vmatpush1.msra.mxu0 0.0
    %370 = vmatprep.subr.mxu0 0.0
    %371 = vmatpush1.msra.mxu0 0.0
    %372 = vmatprep.subr.mxu0 0.0
    %373 = vmatpush1.msra.mxu0 0.0
    %374 = vmatprep.subr.mxu0 0.0
    %375 = vmatpush1.msra.mxu0 %v342
    %376 = vmatprep.subr.mxu0 0.0
    %377 = vmatpush2.msra.mxu0 0.0
    %378 = vmatprep.subr.mxu0 0.0
    %379 = vmatpush2.msra.mxu0 0.0
    %380 = vmatprep.subr.mxu0 0.0
    %381 = vmatpush2.msra.mxu0 0.0
    %382 = vmatprep.subr.mxu0 0.0
    %383 = vmatpush2.msra.mxu0 0.0
    %384 = vmatprep.subr.mxu0 0.0
    %385 = vmatpush2.msra.mxu0 0.0
    %386 = vmatprep.subr.mxu0 0.0
    %387 = vmatpush2.msra.mxu0 0.0
    %388 = vmatprep.subr.mxu0 0.0
    %389 = vmatpush2.msra.mxu0 0.0
    %390 = vmatprep.subr.mxu0 0.0
    %391 = vmatpush2.msra.mxu0 0.0
    %392 = vmatprep.subr.mxu0 0.0
    %393 = vmatpush2.msra.mxu0 0.0
    %394 = vmatprep.subr.mxu0 0.0
    %395 = vmatpush2.msra.mxu0 0.0
    %396 = vmatprep.subr.mxu0 0.0
    %397 = vmatpush2.msra.mxu0 0.0
    %398 = vmatprep.subr.mxu0 0.0
    %399 = vmatpush2.msra.mxu0 0.0
    %400 = vmatprep.subr.mxu0 0.0
    %401 = vmatpush2.msra.mxu0 0.0
    %402 = vmatprep.subr.mxu0 0.0
    %403 = vmatpush2.msra.mxu0 0.0
    %404 = vmatprep.subr.mxu0 0.0
    %405 = vmatpush2.msra.mxu0 0.0
    %406 = vmatprep.subr.mxu0 0.0
    %407 = vmatpush2.msra.mxu0 0.0
    %408 = vmatprep.mubr.f32.mxu0 0.0
    %409 = vmatmul.mubr.f32.gmra.mxu0 %v155
    %v410 = vpop.f32.mrf.mxu0
    %v411 = vadd.f32 %v339, %v410
    %v412 = vpop.f32.mrf.mxu0
    %413 = vdwg.mxu0
    %v414 = vadd.f32 %v411, 3.0
    %v415 = vmax.f32 %v414, 0.0
    %v416 = vmin.f32 %v415, 6.0
    %v417 = vmul.f32 %v416, 0.16666667
    %v418 = vsub.f32 %v417, 0.5
    %v419 = vmul.f32 %v418, 2.0
    %v420 = vadd.f32 %v419, 0.0
    %s421 = scalar_lea.vmem %s5, 4
    %422 = vst.msk [vmem:[%s421] sm:$0x3] %vm238, %v420
    %s423 = scalar_lea.vmem %s3, 6
    %v424 = vld [vmem:[%s423] sm:$0x3]
    %s425 = scalar_lea.vmem %s4, 3
    %v426 = vld [vmem:[%s425] sm:$0x1]
    %v428 = vlaneseq
    %v429 = vshrl.u32 %v428, 7
    %v430 = vsub.s32 0, %v429
    %v431 = vrot.slane %v426, %v430
    %v434 = vsel %vm157, %v424, 0
    %436 = vmatprep.subr.mxu0 0.0
    %437 = vmatpush1.msra.mxu0 0.0
    %438 = vmatprep.subr.mxu0 0.0
    %439 = vmatpush1.msra.mxu0 0.0
    %440 = vmatprep.subr.mxu0 0.0
    %441 = vmatpush1.msra.mxu0 0.0
    %442 = vmatprep.subr.mxu0 0.0
    %443 = vmatpush1.msra.mxu0 0.0
    %444 = vmatprep.subr.mxu0 0.0
    %445 = vmatpush1.msra.mxu0 0.0
    %446 = vmatprep.subr.mxu0 0.0
    %447 = vmatpush1.msra.mxu0 0.0
    %448 = vmatprep.subr.mxu0 0.0
    %449 = vmatpush1.msra.mxu0 0.0
    %450 = vmatprep.subr.mxu0 0.0
    %451 = vmatpush1.msra.mxu0 0.0
    %452 = vmatprep.subr.mxu0 0.0
    %453 = vmatpush1.msra.mxu0 0.0
    %454 = vmatprep.subr.mxu0 0.0
    %455 = vmatpush1.msra.mxu0 0.0
    %456 = vmatprep.subr.mxu0 0.0
    %457 = vmatpush1.msra.mxu0 0.0
    %458 = vmatprep.subr.mxu0 0.0
    %459 = vmatpush1.msra.mxu0 0.0
    %460 = vmatprep.subr.mxu0 0.0
    %461 = vmatpush1.msra.mxu0 0.0
    %462 = vmatprep.subr.mxu0 0.0
    %463 = vmatpush1.msra.mxu0 0.0
    %464 = vmatprep.subr.mxu0 0.0
    %465 = vmatpush1.msra.mxu0 0.0
    %466 = vmatprep.subr.mxu0 0.0
    %467 = vmatpush1.msra.mxu0 %v434
    %468 = vmatprep.subr.mxu0 0.0
    %469 = vmatpush2.msra.mxu0 0.0
    %470 = vmatprep.subr.mxu0 0.0
    %471 = vmatpush2.msra.mxu0 0.0
    %472 = vmatprep.subr.mxu0 0.0
    %473 = vmatpush2.msra.mxu0 0.0
    %474 = vmatprep.subr.mxu0 0.0
    %475 = vmatpush2.msra.mxu0 0.0
    %476 = vmatprep.subr.mxu0 0.0
    %477 = vmatpush2.msra.mxu0 0.0
    %478 = vmatprep.subr.mxu0 0.0
    %479 = vmatpush2.msra.mxu0 0.0
    %480 = vmatprep.subr.mxu0 0.0
    %481 = vmatpush2.msra.mxu0 0.0
    %482 = vmatprep.subr.mxu0 0.0
    %483 = vmatpush2.msra.mxu0 0.0
    %484 = vmatprep.subr.mxu0 0.0
    %485 = vmatpush2.msra.mxu0 0.0
    %486 = vmatprep.subr.mxu0 0.0
    %487 = vmatpush2.msra.mxu0 0.0
    %488 = vmatprep.subr.mxu0 0.0
    %489 = vmatpush2.msra.mxu0 0.0
    %490 = vmatprep.subr.mxu0 0.0
    %491 = vmatpush2.msra.mxu0 0.0
    %492 = vmatprep.subr.mxu0 0.0
    %493 = vmatpush2.msra.mxu0 0.0
    %494 = vmatprep.subr.mxu0 0.0
    %495 = vmatpush2.msra.mxu0 0.0
    %496 = vmatprep.subr.mxu0 0.0
    %497 = vmatpush2.msra.mxu0 0.0
    %498 = vmatprep.subr.mxu0 0.0
    %499 = vmatpush2.msra.mxu0 0.0
    %500 = vmatprep.mubr.f32.mxu0 0.0
    %501 = vmatmul.mubr.f32.gmra.mxu0 %v155
    %v502 = vpop.f32.mrf.mxu0
    %v503 = vadd.f32 %v431, %v502
    %v504 = vpop.f32.mrf.mxu0
    %505 = vdwg.mxu0
    %v506 = vadd.f32 %v503, 3.0
    %v507 = vmax.f32 %v506, 0.0
    %v508 = vmin.f32 %v507, 6.0
    %v509 = vmul.f32 %v508, 0.16666667
    %v510 = vsub.f32 %v509, 0.5
    %v511 = vadd.f32 %v510, 0.0
    %s512 = scalar_lea.vmem %s5, 6
    %513 = vst.msk [vmem:[%s512] sm:$0x3] %vm238, %v511
  $region29: #{dyrelu_forward.2} parent=0 // pred_fallthru
    _
  // Predicated region
  $region30: #{dyrelu_forward.2} parent=0 // pred_check
    _
  $region31: #{dyrelu_forward.2} parent=0 // pred_check_branch
    %515 = sbr.rel (0) target = $region33
  $region32: #{dyrelu_forward.2} parent=0 // pred_region
    _
  $region33: #{dyrelu_forward.2} parent=0 // pred_fallthru
    _
  // Predicated region
  $region34: #{dyrelu_forward.2} parent=0 // pred_check
    _
  $region35: #{dyrelu_forward.2} parent=0 // pred_check_branch
    %517 = sbr.rel (0) target = $region37
  $region36: #{dyrelu_forward.2} parent=0 // pred_region
    _
  $region37: #{dyrelu_forward.2} parent=0 // pred_fallthru
    _

</llo_original>
